<compile_context>
chip_gen: v5e
topology: v5e:2x2
jax: 0.10.0
libtpu: 0.0.40
codegen_flags: <defaults>
</compile_context>

<pallas_src>
import jax
import jax.numpy as jnp
from jax.experimental import pallas as pl
from jax.experimental.pallas import tpu as pltpu

EPS = 1e-5


def _round_up(n, m):
    return ((n + m - 1) // m) * m


# ---------------------------------------------------------------------------
# Kernel: fc1 + ReLU -> fc2 + ReLU -> fc3 (BN already folded into w2/b2, w3/b3)
# ---------------------------------------------------------------------------
def fcnet_kernel(x_ref, w1_ref, b1_ref, w2_ref, b2_ref, w3_ref, b3_ref, o_ref):
    # Keep the f32->bf16 cast in-kernel (a wrapper-side astype would be a
    # separate, un-hidden XLA pass over x).
    x = x_ref[...].astype(jnp.bfloat16)

    # fc1 + ReLU  (bf16 operands, f32 MXU accumulation)
    h = jnp.dot(x, w1_ref[...], preferred_element_type=jnp.float32) + b1_ref[...]
    h = jnp.maximum(h, 0.0)

    # fc2 (BN1 folded in) + ReLU
    h = jnp.dot(h.astype(jnp.bfloat16), w2_ref[...],
                preferred_element_type=jnp.float32) + b2_ref[...]
    h = jnp.maximum(h, 0.0)

    # dropout(p=0.1): identity in eval mode
    # TODO(synk): training-mode dropout would need pltpu.prng_random_bits masking

    # fc3 (BN2 folded in); output is the true out_feature width (no lane pad)
    o_ref[...] = jnp.dot(h.astype(jnp.bfloat16), w3_ref[...],
                         preferred_element_type=jnp.float32) + b3_ref[...]


# ---------------------------------------------------------------------------
# Wrapper: batch-tiled grid, resident weights, narrow (un-padded) output
# ---------------------------------------------------------------------------
def _choose_tile(B, block_b):
    """Pick a batch tile TB (multiple of 8) and padded batch B_pad.

    Ensures >= 2 grid steps whenever B allows (v7x megacore sharding +
    input/output DMA overlap), while capping TB at block_b and keeping the
    host-side batch pad to at most TB-1 rows.
    """
    B8 = _round_up(B, 8)
    n_min = 2 if B8 >= 16 else 1
    n_steps = max(n_min, pl.cdiv(B8, block_b))
    TB = _round_up(pl.cdiv(B8, n_steps), 8)
    TB = min(TB, block_b)
    B_pad = _round_up(B8, TB)
    return TB, B_pad


def fcnet_forward(x, folded, out_feature, *, block_b=4096):
    B, in_feature = x.shape
    assert folded["w3"].shape[1] == out_feature

    TB, B_pad = _choose_tile(B, block_b)
    if B_pad != B:
        # At most TB-1 zero rows; avoided entirely for aligned batches.
        x = jnp.pad(x, ((0, B_pad - B), (0, 0)))
    grid = (B_pad // TB,)

    def tile_map(i):        # x / out: walk the batch axis
        return (i, 0)

    def resident_map(i):    # weights / biases: same block every step (VMEM-resident)
        return (0, 0)

    in_specs = [
        pl.BlockSpec((TB, in_feature), tile_map),
        pl.BlockSpec(folded["w1"].shape, resident_map),
        pl.BlockSpec(folded["b1"].shape, resident_map),
        pl.BlockSpec(folded["w2"].shape, resident_map),
        pl.BlockSpec(folded["b2"].shape, resident_map),
        pl.BlockSpec(folded["w3"].shape, resident_map),
        pl.BlockSpec(folded["b3"].shape, resident_map),
    ]

    out = pl.pallas_call(
        fcnet_kernel,
        out_shape=jax.ShapeDtypeStruct((B_pad, out_feature), jnp.float32),
        grid=grid,
        in_specs=in_specs,
        out_specs=pl.BlockSpec((TB, out_feature), tile_map),
        compiler_params=pltpu.CompilerParams(
            dimension_semantics=("parallel",)),
    )(x, folded["w1"], folded["b1"], folded["w2"], folded["b2"],
      folded["w3"], folded["b3"])

    if B_pad != B:
        out = out[:B]
    return out


# ---------------------------------------------------------------------------
# Host-side param construction + BN folding / bf16
# ---------------------------------------------------------------------------
def make_params(key, in_feature, out_feature):
    ks = jax.random.split(key, 6)
    f32 = jnp.float32

    def linear(k, fan_in, fan_out):
        # torch nn.Linear default init: U(-1/sqrt(fan_in), 1/sqrt(fan_in))
        kw, kb = jax.random.split(k)
        bound = 1.0 / jnp.sqrt(f32(fan_in))
        w = jax.random.uniform(kw, (fan_in, fan_out), f32, -bound, bound)
        b = jax.random.uniform(kb, (1, fan_out), f32, -bound, bound)
        return w, b

    w1, b1 = linear(ks[0], in_feature, 256)
    w2, b2 = linear(ks[1], 256, 64)
    w3, b3 = linear(ks[2], 64, out_feature)

    # BatchNorm params (perturbed from torch defaults so the affine path
    # is actually exercised).
    g1 = 1.0 + 0.1 * jax.random.normal(ks[3], (1, 256), f32)
    be1 = 0.1 * jax.random.normal(ks[4], (1, 256), f32)
    m1 = jnp.zeros((1, 256), f32)
    v1 = jnp.ones((1, 256), f32)

    g2 = 1.0 + 0.1 * jax.random.normal(ks[5], (1, 64), f32)
    be2 = jnp.zeros((1, 64), f32)
    m2 = jnp.zeros((1, 64), f32)
    v2 = jnp.ones((1, 64), f32)

    return dict(w1=w1, b1=b1, g1=g1, be1=be1, m1=m1, v1=v1,
                w2=w2, b2=b2, g2=g2, be2=be2, m2=m2, v2=v2,
                w3=w3, b3=b3)


def fold_params(p):
    """Fold eval-mode BN into the following linear; bf16 weights (no padding)."""
    f32, bf16 = jnp.float32, jnp.bfloat16

    # BN1 folded into fc2:  y = relu(fc1) -> BN1 -> fc2
    s1 = p["g1"] * jax.lax.rsqrt(p["v1"] + EPS)       # (1, 256)
    t1 = p["be1"] - p["m1"] * s1                       # (1, 256)
    w2f = p["w2"] * s1.reshape(-1, 1)                  # scale rows of w2
    b2f = t1 @ p["w2"] + p["b2"]

    # BN2 folded into fc3
    s2 = p["g2"] * jax.lax.rsqrt(p["v2"] + EPS)        # (1, 64)
    t2 = p["be2"] - p["m2"] * s2
    w3f = p["w3"] * s2.reshape(-1, 1)
    b3f = t2 @ p["w3"] + p["b3"]

    return dict(
        w1=p["w1"].astype(bf16), b1=p["b1"].astype(f32),
        w2=w2f.astype(bf16),     b2=b2f.astype(f32),
        w3=w3f.astype(bf16),     b3=b3f.astype(f32),
    )


# ---------------------------------------------------------------------------
# Pure-JAX f32 reference (matches the PyTorch module in eval mode)
# ---------------------------------------------------------------------------
def fcnet_ref(x, p):
    h = jnp.maximum(x @ p["w1"] + p["b1"], 0.0)
    h = (h - p["m1"]) / jnp.sqrt(p["v1"] + EPS) * p["g1"] + p["be1"]
    h = jnp.maximum(h @ p["w2"] + p["b2"], 0.0)
    h = (h - p["m2"]) / jnp.sqrt(p["v2"] + EPS) * p["g2"] + p["be2"]
    return h @ p["w3"] + p["b3"]  # dropout = identity in eval


if __name__ == "__main__":
    key = jax.random.PRNGKey(0)
    kx, kx2, kp = jax.random.split(key, 3)

    in_feature, out_feature = 32, 16
    params = make_params(kp, in_feature, out_feature)
    folded = fold_params(params)

    # Small canonical case (single grid step).
    B = 8
    x = jax.random.normal(kx, (B, in_feature), jnp.float32)
    out = jax.block_until_ready(fcnet_forward(x, folded, out_feature))
    ref = fcnet_ref(x, params)
    assert out.shape == (B, out_feature)
    # bf16 matmul operands with f32 accumulation -> loosened tolerance vs f32 ref
    assert jnp.allclose(out, ref, atol=5e-2, rtol=5e-2), "mismatch vs JAX reference"

    # Non-aligned batch exercising the multi-step grid + ragged-tail path.
    B2 = 40
    x2 = jax.random.normal(kx2, (B2, in_feature), jnp.float32)
    out2 = jax.block_until_ready(fcnet_forward(x2, folded, out_feature))
    ref2 = fcnet_ref(x2, params)
    assert out2.shape == (B2, out_feature)
    assert jnp.allclose(out2, ref2, atol=5e-2, rtol=5e-2), "mismatch vs JAX reference (B=40)"

    print("KERNEL_OK")
</pallas_src>

<mosaic_0001>
module attributes {stable_mosaic.version = 11 : i64} {
  func.func @fcnet_kernel(%arg0: i32, %arg1: memref<8x32xf32, #tpu.memory_space<vmem>>, %arg2: memref<32x256xbf16, #tpu.memory_space<vmem>>, %arg3: memref<1x256xf32, #tpu.memory_space<vmem>>, %arg4: memref<256x64xbf16, #tpu.memory_space<vmem>>, %arg5: memref<1x64xf32, #tpu.memory_space<vmem>>, %arg6: memref<64x16xbf16, #tpu.memory_space<vmem>>, %arg7: memref<1x16xf32, #tpu.memory_space<vmem>>, %arg8: memref<8x16xf32, #tpu.memory_space<vmem>>) attributes {dimension_semantics = [#tpu.dimension_semantics<parallel>], iteration_bounds = array<i64: 1>, scalar_prefetch = 0 : i64, scratch_operands = 0 : i64, tpu.core_type = #tpu.core_type<tc>, window_params = [{transform_indices = @transform_0, window_bounds = array<i64: 8, 32>}, {pipeline_mode = #tpu.pipeline_mode<synchronous>, transform_indices = @transform_1, window_bounds = array<i64: 32, 256>}, {pipeline_mode = #tpu.pipeline_mode<synchronous>, transform_indices = @transform_2, window_bounds = array<i64: 1, 256>}, {pipeline_mode = #tpu.pipeline_mode<synchronous>, transform_indices = @transform_3, window_bounds = array<i64: 256, 64>}, {pipeline_mode = #tpu.pipeline_mode<synchronous>, transform_indices = @transform_4, window_bounds = array<i64: 1, 64>}, {pipeline_mode = #tpu.pipeline_mode<synchronous>, transform_indices = @transform_5, window_bounds = array<i64: 64, 16>}, {pipeline_mode = #tpu.pipeline_mode<synchronous>, transform_indices = @transform_6, window_bounds = array<i64: 1, 16>}, {transform_indices = @transform_7, window_bounds = array<i64: 8, 16>}]} {
    %c0 = arith.constant 0 : index
    %c0_0 = arith.constant 0 : index
    %0 = vector.load %arg1[%c0, %c0_0] : memref<8x32xf32, #tpu.memory_space<vmem>>, vector<8x32xf32>
    %1 = arith.truncf %0 : vector<8x32xf32> to vector<8x32xbf16>
    %c0_1 = arith.constant 0 : index
    %c0_2 = arith.constant 0 : index
    %2 = vector.load %arg2[%c0_1, %c0_2] : memref<32x256xbf16, #tpu.memory_space<vmem>>, vector<32x256xbf16>
    %cst = arith.constant dense<0.000000e+00> : vector<8x256xf32>
    %3 = tpu.matmul %1, %2, %cst {dimension_numbers = #tpu.dot_dimension_numbers<[1], [0], [0], [1], [0, 0, 1, 1], [], []>} : vector<8x32xbf16>, vector<32x256xbf16>, vector<8x256xf32> -> vector<8x256xf32>
    %c0_3 = arith.constant 0 : index
    %c0_4 = arith.constant 0 : index
    %4 = vector.load %arg3[%c0_3, %c0_4] : memref<1x256xf32, #tpu.memory_space<vmem>>, vector<1x256xf32>
    %5 = vector.broadcast %4 : vector<1x256xf32> to vector<8x256xf32>
    %6 = arith.addf %3, %5 : vector<8x256xf32>
    %cst_5 = arith.constant 0.000000e+00 : f32
    %7 = vector.broadcast %cst_5 : f32 to vector<8x256xf32>
    %8 = arith.maximumf %6, %7 : vector<8x256xf32>
    %9 = arith.truncf %8 : vector<8x256xf32> to vector<8x256xbf16>
    %c0_6 = arith.constant 0 : index
    %c0_7 = arith.constant 0 : index
    %10 = vector.load %arg4[%c0_6, %c0_7] : memref<256x64xbf16, #tpu.memory_space<vmem>>, vector<256x64xbf16>
    %cst_8 = arith.constant dense<0.000000e+00> : vector<8x64xf32>
    %11 = tpu.matmul %9, %10, %cst_8 {dimension_numbers = #tpu.dot_dimension_numbers<[1], [0], [0], [1], [0, 0, 1, 1], [], []>} : vector<8x256xbf16>, vector<256x64xbf16>, vector<8x64xf32> -> vector<8x64xf32>
    %c0_9 = arith.constant 0 : index
    %c0_10 = arith.constant 0 : index
    %12 = vector.load %arg5[%c0_9, %c0_10] : memref<1x64xf32, #tpu.memory_space<vmem>>, vector<1x64xf32>
    %13 = vector.broadcast %12 : vector<1x64xf32> to vector<8x64xf32>
    %14 = arith.addf %11, %13 : vector<8x64xf32>
    %cst_11 = arith.constant 0.000000e+00 : f32
    %15 = vector.broadcast %cst_11 : f32 to vector<8x64xf32>
    %16 = arith.maximumf %14, %15 : vector<8x64xf32>
    %17 = arith.truncf %16 : vector<8x64xf32> to vector<8x64xbf16>
    %c0_12 = arith.constant 0 : index
    %c0_13 = arith.constant 0 : index
    %18 = vector.load %arg6[%c0_12, %c0_13] : memref<64x16xbf16, #tpu.memory_space<vmem>>, vector<64x16xbf16>
    %cst_14 = arith.constant dense<0.000000e+00> : vector<8x16xf32>
    %19 = tpu.matmul %17, %18, %cst_14 {dimension_numbers = #tpu.dot_dimension_numbers<[1], [0], [0], [1], [0, 0, 1, 1], [], []>} : vector<8x64xbf16>, vector<64x16xbf16>, vector<8x16xf32> -> vector<8x16xf32>
    %c0_15 = arith.constant 0 : index
    %c0_16 = arith.constant 0 : index
    %20 = vector.load %arg7[%c0_15, %c0_16] : memref<1x16xf32, #tpu.memory_space<vmem>>, vector<1x16xf32>
    %21 = vector.broadcast %20 : vector<1x16xf32> to vector<8x16xf32>
    %22 = arith.addf %19, %21 : vector<8x16xf32>
    %c0_17 = arith.constant 0 : index
    %c0_18 = arith.constant 0 : index
    %23 = vector.load %arg8[%c0_17, %c0_18] : memref<8x16xf32, #tpu.memory_space<vmem>>, vector<8x16xf32>
    tpu.vector_store %arg8[%c0_17, %c0_18], %22 {strides = array<i32>} : memref<8x16xf32, #tpu.memory_space<vmem>>, vector<8x16xf32>,
    return
  }
  func.func @transform_0(%arg0: i32) -> (i32, i32) {
    %c0_i32 = arith.constant 0 : i32
    %c0_i32_0 = arith.constant 0 : i32
    return %arg0, %c0_i32 : i32, i32
  }
  func.func @transform_1(%arg0: i32) -> (i32, i32) {
    %c0_i32 = arith.constant 0 : i32
    %c0_i32_0 = arith.constant 0 : i32
    %c0_i32_1 = arith.constant 0 : i32
    return %c0_i32, %c0_i32_0 : i32, i32
  }
  func.func @transform_2(%arg0: i32) -> (i32, i32) {
    %c0_i32 = arith.constant 0 : i32
    %c0_i32_0 = arith.constant 0 : i32
    %c0_i32_1 = arith.constant 0 : i32
    return %c0_i32, %c0_i32_0 : i32, i32
  }
  func.func @transform_3(%arg0: i32) -> (i32, i32) {
    %c0_i32 = arith.constant 0 : i32
    %c0_i32_0 = arith.constant 0 : i32
    %c0_i32_1 = arith.constant 0 : i32
    return %c0_i32, %c0_i32_0 : i32, i32
  }
  func.func @transform_4(%arg0: i32) -> (i32, i32) {
    %c0_i32 = arith.constant 0 : i32
    %c0_i32_0 = arith.constant 0 : i32
    %c0_i32_1 = arith.constant 0 : i32
    return %c0_i32, %c0_i32_0 : i32, i32
  }
  func.func @transform_5(%arg0: i32) -> (i32, i32) {
    %c0_i32 = arith.constant 0 : i32
    %c0_i32_0 = arith.constant 0 : i32
    %c0_i32_1 = arith.constant 0 : i32
    return %c0_i32, %c0_i32_0 : i32, i32
  }
  func.func @transform_6(%arg0: i32) -> (i32, i32) {
    %c0_i32 = arith.constant 0 : i32
    %c0_i32_0 = arith.constant 0 : i32
    %c0_i32_1 = arith.constant 0 : i32
    return %c0_i32, %c0_i32_0 : i32, i32
  }
  func.func @transform_7(%arg0: i32) -> (i32, i32) {
    %c0_i32 = arith.constant 0 : i32
    %c0_i32_0 = arith.constant 0 : i32
    return %arg0, %c0_i32 : i32, i32
  }
}

</mosaic_0001>

<llo_original>
// kernel: tpu_custom_call.1
$region0: #{tpu_custom_call.1}
  #allocation0 [shape = 'u32[]', space=smem, size = 0x4, offset = 0x4, fixed_abs, tag = 'smem constant byte address 0x4 - core index']
  #allocation1 [shape = 'u32[72,128]{1,0:T(1,128)}', space=vmem, size = 0x9000, scoped, tag = 'internal scratch']
  %s0 = inlined_call_operand.vmem [shape: f32[8,32], index: 0, kind: input, shape index: {}]
  %s1 = inlined_call_operand.vmem [shape: bf16[32,256], index: 1, kind: input, shape index: {}]
  %s2 = inlined_call_operand.vmem [shape: f32[1,256], index: 2, kind: input, shape index: {}]
  %s3 = inlined_call_operand.vmem [shape: bf16[256,64], index: 3, kind: input, shape index: {}]
  %s4 = inlined_call_operand.vmem [shape: f32[1,64], index: 4, kind: input, shape index: {}]
  %s5 = inlined_call_operand.vmem [shape: bf16[64,16], index: 5, kind: input, shape index: {}]
  %s6 = inlined_call_operand.vmem [shape: f32[1,16], index: 6, kind: input, shape index: {}]
  %s7 = inlined_call_operand.hbm [shape: f32[8,16], index: 7, kind: output, shape index: {}]
  %s8 = sld [smem:[#allocation0]]
  $region38: #{tpu_custom_call.1} parent=0
    _
  %s10 = ssub.s32 1, %s8
  %s11 = scalar_select 0, %s10, %s8
  $region1: #{tpu_custom_call.1} parent=0
    #allocation2 [shape = 'u8[4096]{0}', space=vmem, size = 0x1000, scoped, tag = 'output window, operand 0, single buffered']
    #allocation3 [shape = 's32[1]{0}', space=sflag, size = 0x4, scoped, tag = 'scoped memory for tpu_custom_call.1']
    %12 = vsyncpa [#allocation3], 0
    // Predicated region
    $region2: #{tpu_custom_call.1} parent=1 // pred_check
      _
    $region3: #{tpu_custom_call.1} parent=1 // pred_check_branch
      %14 = sbr.rel (0) target = $region5
    $region4: #{tpu_custom_call.1} parent=1 // pred_region
      _
    $region5: #{tpu_custom_call.1} parent=1 // pred_fallthru
      _
    // Predicated region
    $region6: #{tpu_custom_call.1} parent=1 // pred_check
      _
    $region7: #{tpu_custom_call.1} parent=1 // pred_check_branch
      %16 = sbr.rel (0) target = $region9
    $region8: #{tpu_custom_call.1} parent=1 // pred_region
      _
    $region9: #{tpu_custom_call.1} parent=1 // pred_fallthru
      _
    // Predicated region
    $region10: #{tpu_custom_call.1} parent=1 // pred_check
      _
    $region11: #{tpu_custom_call.1} parent=1 // pred_check_branch
      %18 = sbr.rel (0) target = $region13
    $region12: #{tpu_custom_call.1} parent=1 // pred_region
      _
    $region13: #{tpu_custom_call.1} parent=1 // pred_fallthru
      _
    // Predicated region
    $region14: #{tpu_custom_call.1} parent=1 // pred_check
      _
    $region15: #{tpu_custom_call.1} parent=1 // pred_check_branch
      %20 = sbr.rel (0) target = $region17
    $region16: #{tpu_custom_call.1} parent=1 // pred_region
      _
    $region17: #{tpu_custom_call.1} parent=1 // pred_fallthru
      _
    // Predicated region
    $region18: #{tpu_custom_call.1} parent=1 // pred_check
      _
    $region19: #{tpu_custom_call.1} parent=1 // pred_check_branch
      %22 = sbr.rel (0) target = $region21
    $region20: #{tpu_custom_call.1} parent=1 // pred_region
      _
    $region21: #{tpu_custom_call.1} parent=1 // pred_fallthru
      _
    // Predicated region
    $region22: #{tpu_custom_call.1} parent=1 // pred_check
      _
    $region23: #{tpu_custom_call.1} parent=1 // pred_check_branch
      %24 = sbr.rel (0) target = $region25
    $region24: #{tpu_custom_call.1} parent=1 // pred_region
      _
    $region25: #{tpu_custom_call.1} parent=1 // pred_fallthru
      _
    // Predicated region
    $region26: #{tpu_custom_call.1} parent=1 // pred_check
      _
    $region27: #{tpu_custom_call.1} parent=1 // pred_check_branch
      %26 = sbr.rel (0) target = $region29
    $region28: #{tpu_custom_call.1} parent=1 // pred_region
      _
    $region29: #{tpu_custom_call.1} parent=1 // pred_fallthru
      _
    %v28 = vld [vmem:[%s0] sm:$0xff]
    %v29 = vpack.c.bf16 %v28, %v28
    %v30 = vld [vmem:[%s1] sm:$0xff]
    %v31 = vld [vmem:[%s1 + $0x8] sm:$0xff]
    %v32 = vld [vmem:[%s1 + $0x10] sm:$0xff]
    %v33 = vld [vmem:[%s1 + $0x18] sm:$0xff]
    %v34 = vld [vmem:[%s2] sm:$0x3]
    %v36 = vperm.slane %v34, 0
    %v37 = vperm.slane %v34, 1
    %v44 = vunpack.c.l.b16 %v30
    %v45 = vunpack.c.h.b16 %v30
    %v46 = vunpack.c.l.b16 %v31
    %v47 = vunpack.c.h.b16 %v31
    %v48 = vunpack.c.l.b16 %v32
    %v49 = vunpack.c.h.b16 %v32
    %v50 = vunpack.c.l.b16 %v33
    %v51 = vunpack.c.h.b16 %v33
    %v52 = vpack.c.b16 %v46, %v44
    %v53 = vpack.c.b16 %v47, %v45
    %v54 = vpack.c.b16 %v50, %v48
    %v55 = vpack.c.b16 %v51, %v49
    %vm60 = vcmask 261120
    %v62 = vsel %vm60, %v29, 0
    %64 = vmatpush.bf16.msra.mxu0 0
    %65 = vmatpush.bf16.msra.mxu0 0
    %66 = vmatpush.bf16.msra.mxu0 0
    %67 = vmatpush.bf16.msra.mxu0 0
    %68 = vmatpush.bf16.msra.mxu0 0
    %69 = vmatpush.bf16.msra.mxu0 0
    %70 = vmatpush.bf16.msra.mxu0 %v54
    %71 = vmatpush.bf16.msra.mxu0 %v52
    %72 = vmatmul.bf16.gmra.mxu0 %v62
    %v73 = vpop.f32.mrf.mxu0
    %v74 = vadd.f32 %v36, %v73
    %v75 = vpop.f32.mrf.mxu0
    %76 = vdwg.mxu0
    %77 = vmatpush.bf16.msra.mxu0 0
    %78 = vmatpush.bf16.msra.mxu0 0
    %79 = vmatpush.bf16.msra.mxu0 0
    %80 = vmatpush.bf16.msra.mxu0 0
    %81 = vmatpush.bf16.msra.mxu0 0
    %82 = vmatpush.bf16.msra.mxu0 0
    %83 = vmatpush.bf16.msra.mxu0 %v55
    %84 = vmatpush.bf16.msra.mxu0 %v53
    %85 = vmatmul.bf16.gmra.mxu0 %v62
    %v86 = vpop.f32.mrf.mxu0
    %v87 = vadd.f32 %v37, %v86
    %v88 = vpop.f32.mrf.mxu0
    %89 = vdwg.mxu0
    %v90 = vmax.f32 %v74, 0.0
    %v91 = vmax.f32 %v87, 0.0
    %v92 = vpack.c.bf16 %v90, %v90
    %v93 = vpack.c.bf16 %v91, %v91
    %v94 = vld [vmem:[%s3] sm:$0xf]
    %v95 = vld [vmem:[%s3 + $0x4] sm:$0xf]
    %v96 = vld [vmem:[%s3 + $0x8] sm:$0xf]
    %v97 = vld [vmem:[%s3 + $0xc] sm:$0xf]
    %v98 = vld [vmem:[%s3 + $0x10] sm:$0xf]
    %v99 = vld [vmem:[%s3 + $0x14] sm:$0xf]
    %v100 = vld [vmem:[%s3 + $0x18] sm:$0xf]
    %v101 = vld [vmem:[%s3 + $0x1c] sm:$0xf]
    %v102 = vld [vmem:[%s3 + $0x20] sm:$0xf]
    %v103 = vld [vmem:[%s3 + $0x24] sm:$0xf]
    %v104 = vld [vmem:[%s3 + $0x28] sm:$0xf]
    %v105 = vld [vmem:[%s3 + $0x2c] sm:$0xf]
    %v106 = vld [vmem:[%s3 + $0x30] sm:$0xf]
    %v107 = vld [vmem:[%s3 + $0x34] sm:$0xf]
    %v108 = vld [vmem:[%s3 + $0x38] sm:$0xf]
    %v109 = vld [vmem:[%s3 + $0x3c] sm:$0xf]
    %v110 = vld [vmem:[%s3 + $0x40] sm:$0xf]
    %v111 = vld [vmem:[%s3 + $0x44] sm:$0xf]
    %v112 = vld [vmem:[%s3 + $0x48] sm:$0xf]
    %v113 = vld [vmem:[%s3 + $0x4c] sm:$0xf]
    %v114 = vld [vmem:[%s3 + $0x50] sm:$0xf]
    %v115 = vld [vmem:[%s3 + $0x54] sm:$0xf]
    %v116 = vld [vmem:[%s3 + $0x58] sm:$0xf]
    %v117 = vld [vmem:[%s3 + $0x5c] sm:$0xf]
    %v118 = vld [vmem:[%s3 + $0x60] sm:$0xf]
    %v119 = vld [vmem:[%s3 + $0x64] sm:$0xf]
    %v120 = vld [vmem:[%s3 + $0x68] sm:$0xf]
    %v121 = vld [vmem:[%s3 + $0x6c] sm:$0xf]
    %v122 = vld [vmem:[%s3 + $0x70] sm:$0xf]
    %v123 = vld [vmem:[%s3 + $0x74] sm:$0xf]
    %v124 = vld [vmem:[%s3 + $0x78] sm:$0xf]
    %v125 = vld [vmem:[%s3 + $0x7c] sm:$0xf]
    %v126 = vld [vmem:[%s4] sm:$0x1]
    %v128 = vperm.slane %v126, 0
    %v162 = vunpack.c.l.b16 %v94
    %v163 = vunpack.c.l.b16 %v95
    %v164 = vunpack.c.l.b16 %v96
    %v165 = vunpack.c.l.b16 %v97
    %v166 = vunpack.c.l.b16 %v98
    %v167 = vunpack.c.l.b16 %v99
    %v168 = vunpack.c.l.b16 %v100
    %v169 = vunpack.c.l.b16 %v101
    %v170 = vunpack.c.l.b16 %v102
    %v171 = vunpack.c.l.b16 %v103
    %v172 = vunpack.c.l.b16 %v104
    %v173 = vunpack.c.l.b16 %v105
    %v174 = vunpack.c.l.b16 %v106
    %v175 = vunpack.c.l.b16 %v107
    %v176 = vunpack.c.l.b16 %v108
    %v177 = vunpack.c.l.b16 %v109
    %v178 = vunpack.c.l.b16 %v110
    %v179 = vunpack.c.l.b16 %v111
    %v180 = vunpack.c.l.b16 %v112
    %v181 = vunpack.c.l.b16 %v113
    %v182 = vunpack.c.l.b16 %v114
    %v183 = vunpack.c.l.b16 %v115
    %v184 = vunpack.c.l.b16 %v116
    %v185 = vunpack.c.l.b16 %v117
    %v186 = vunpack.c.l.b16 %v118
    %v187 = vunpack.c.l.b16 %v119
    %v188 = vunpack.c.l.b16 %v120
    %v189 = vunpack.c.l.b16 %v121
    %v190 = vunpack.c.l.b16 %v122
    %v191 = vunpack.c.l.b16 %v123
    %v192 = vunpack.c.l.b16 %v124
    %v193 = vunpack.c.l.b16 %v125
    %v194 = vpack.c.b16 %v163, %v162
    %v195 = vpack.c.b16 %v165, %v164
    %v196 = vpack.c.b16 %v167, %v166
    %v197 = vpack.c.b16 %v169, %v168
    %v198 = vpack.c.b16 %v171, %v170
    %v199 = vpack.c.b16 %v173, %v172
    %v200 = vpack.c.b16 %v175, %v174
    %v201 = vpack.c.b16 %v177, %v176
    %v202 = vpack.c.b16 %v179, %v178
    %v203 = vpack.c.b16 %v181, %v180
    %v204 = vpack.c.b16 %v183, %v182
    %v205 = vpack.c.b16 %v185, %v184
    %v206 = vpack.c.b16 %v187, %v186
    %v207 = vpack.c.b16 %v189, %v188
    %v208 = vpack.c.b16 %v191, %v190
    %v209 = vpack.c.b16 %v193, %v192
    %226 = vmatpush.bf16.msra.mxu0 %v201
    %227 = vmatpush.bf16.msra.mxu0 %v200
    %228 = vmatpush.bf16.msra.mxu0 %v199
    %229 = vmatpush.bf16.msra.mxu0 %v198
    %230 = vmatpush.bf16.msra.mxu0 %v197
    %231 = vmatpush.bf16.msra.mxu0 %v196
    %232 = vmatpush.bf16.msra.mxu0 %v195
    %233 = vmatpush.bf16.msra.mxu0 %v194
    %234 = vmatmul.bf16.gmra.mxu0 %v92
    %v235 = vpop.f32.mrf.mxu0
    %v236 = vadd.f32 %v128, %v235
    %v237 = vpop.f32.mrf.mxu0
    %238 = vdwg.mxu0
    %239 = vmatpush.bf16.msra.mxu0 %v209
    %240 = vmatpush.bf16.msra.mxu0 %v208
    %241 = vmatpush.bf16.msra.mxu0 %v207
    %242 = vmatpush.bf16.msra.mxu0 %v206
    %243 = vmatpush.bf16.msra.mxu0 %v205
    %244 = vmatpush.bf16.msra.mxu0 %v204
    %245 = vmatpush.bf16.msra.mxu0 %v203
    %246 = vmatpush.bf16.msra.mxu0 %v202
    %247 = vmatmul.bf16.gmra.mxu0 %v93
    %v248 = vpop.f32.mrf.mxu0
    %v249 = vadd.f32 %v236, %v248
    %v250 = vpop.f32.mrf.mxu0
    %251 = vdwg.mxu0
    %v252 = vmax.f32 %v249, 0.0
    %v253 = vpack.c.bf16 %v252, %v252
    %v254 = vld [vmem:[%s5] sm:$0xf]
    %v255 = vld [vmem:[%s5 + $0x4] sm:$0xf]
    %v256 = vld [vmem:[%s5 + $0x8] sm:$0xf]
    %v257 = vld [vmem:[%s5 + $0xc] sm:$0xf]
    %v258 = vld [vmem:[%s5 + $0x10] sm:$0xf]
    %v259 = vld [vmem:[%s5 + $0x14] sm:$0xf]
    %v260 = vld [vmem:[%s5 + $0x18] sm:$0xf]
    %v261 = vld [vmem:[%s5 + $0x1c] sm:$0xf]
    %v262 = vld [vmem:[%s6] sm:$0x1]
    %v264 = vperm.slane %v262, 0
    %v274 = vunpack.c.l.b16 %v254
    %v275 = vunpack.c.l.b16 %v255
    %v276 = vunpack.c.l.b16 %v256
    %v277 = vunpack.c.l.b16 %v257
    %v278 = vunpack.c.l.b16 %v258
    %v279 = vunpack.c.l.b16 %v259
    %v280 = vunpack.c.l.b16 %v260
    %v281 = vunpack.c.l.b16 %v261
    %v282 = vpack.c.b16 %v275, %v274
    %v283 = vpack.c.b16 %v277, %v276
    %v284 = vpack.c.b16 %v279, %v278
    %v285 = vpack.c.b16 %v281, %v280
    %vm290 = vcmask 523264
    %v292 = vsel %vm290, %v253, 0
    %294 = vmatpush.bf16.msra.mxu0 0
    %295 = vmatpush.bf16.msra.mxu0 0
    %296 = vmatpush.bf16.msra.mxu0 0
    %297 = vmatpush.bf16.msra.mxu0 0
    %298 = vmatpush.bf16.msra.mxu0 %v285
    %299 = vmatpush.bf16.msra.mxu0 %v284
    %300 = vmatpush.bf16.msra.mxu0 %v283
    %301 = vmatpush.bf16.msra.mxu0 %v282
    %302 = vmatmul.bf16.gmra.mxu0 %v292
    %v303 = vpop.f32.mrf.mxu0
    %v304 = vadd.f32 %v264, %v303
    %v305 = vpop.f32.mrf.mxu0
    %306 = vdwg.mxu0
    %vm307 = vcmask 130048
    %308 = vst.msk [vmem:[#allocation2] sm:$0xff] %vm307, %v304
    // Predicated region
    $region30: #{tpu_custom_call.1} parent=1 // pred_check
      _
    $region31: #{tpu_custom_call.1} parent=1 // pred_check_branch
      %310 = sbr.rel (0) target = $region33
    $region32: #{tpu_custom_call.1} parent=1 // pred_region
      %312 = vsyncadd [#allocation3], 0
      %s314 = sshll.u32 [#allocation2], 4
      %s315 = int_to_ptr.vmem [resolvable:$true] %s314
      %s316 = sshll.u32 %s7, 4
      %s317 = int_to_ptr.hbm [resolvable:$true] %s316
      %319 = dma.vmem_to_hbm [thread:$0]  %s315, 128, %s317, [#allocation3]
    $region33: #{tpu_custom_call.1} parent=1 // pred_fallthru
      _
    // Predicated region
    $region34: #{tpu_custom_call.1} parent=1 // pred_check
      _
    $region35: #{tpu_custom_call.1} parent=1 // pred_check_branch
      %321 = sbr.rel (0) target = $region37
    $region36: #{tpu_custom_call.1} parent=1 // pred_region
      %323 = dma.done [#allocation3], 128
    $region37: #{tpu_custom_call.1} parent=1 // pred_fallthru
      _
    %324 = vsyncpa [#allocation3], 1

</llo_original>
